<compile_context>
chip_gen: v7x
topology: tpu7x:2x2x1
jax: 0.10.0
libtpu: 0.0.40
codegen_flags: <defaults>
</compile_context>

<pallas_src>
import math
from functools import partial

import jax
import jax.numpy as jnp
from jax.experimental import pallas as pl
from jax.experimental.pallas import tpu as pltpu


VMEM_LIMIT_BYTES = 48 * 1024 * 1024   # > v5e/v6e/v7x scoped defaults, < v7x 64 MiB physical


# ----------------------------- small helpers -----------------------------

def _round_up(x, m):
    return (x + m - 1) // m * m


def _fit(dim, target):
    """Pick a tile for `dim`: full dim if <= target (weight-resident path), otherwise a
    256/128-aligned divisor, otherwise `target` with zero-padding."""
    if dim <= target:
        return dim, dim
    for t in (target, 256, 128):
        if t <= target and dim % t == 0:
            return t, dim
    return target, _round_up(dim, target)


def _pad_to(x, axis, size, value=0.0):
    pad = size - x.shape[axis]
    if pad == 0:
        return x
    widths = [(0, 0)] * x.ndim
    widths[axis] = (0, pad)
    return jnp.pad(x, widths, constant_values=value)


def _gelu(x):
    # TODO(synk): HF BERT default is exact erf-GELU; tanh approximation used here.
    return 0.5 * x * (1.0 + jnp.tanh(0.7978845608028654 * (x + 0.044715 * x * x * x)))


# ----------------------------- tiled matmul (+ bias + optional activation) -----------------------------

def _matmul_kernel(x_ref, w_ref, b_ref, o_ref, acc_ref, *, activation):
    @pl.when(pl.program_id(2) == 0)
    def _():
        acc_ref[...] = jnp.zeros_like(acc_ref)

    acc_ref[...] += jnp.dot(x_ref[...], w_ref[...], preferred_element_type=jnp.float32)

    @pl.when(pl.program_id(2) == pl.num_programs(2) - 1)
    def _():
        y = acc_ref[...] + b_ref[...]
        if activation == "gelu":
            y = _gelu(y)
        elif activation == "tanh":
            y = jnp.tanh(y)
        o_ref[...] = y.astype(o_ref.dtype)


def matmul_bias(x, w, b, activation=None, out_dtype=jnp.bfloat16,
                tm=256, tn=3072, tk=3072):
    """act(x @ w + b). x:(M,K), w:(K,N), b:(N,).  bf16 MXU inputs, f32 accumulation.
    With the default tn/tk, BERT-sized weights stay fully VMEM-resident (grid K/N = 1)."""
    M, K = x.shape
    N = w.shape[1]
    tm, Mp = _fit(M, tm)
    tn, Np = _fit(N, tn)
    tk, Kp = _fit(K, tk)

    xb = _pad_to(_pad_to(x.astype(jnp.bfloat16), 0, Mp), 1, Kp)
    wb = _pad_to(_pad_to(w.astype(jnp.bfloat16), 0, Kp), 1, Np)
    bb = _pad_to(b.astype(jnp.float32).reshape(1, N), 1, Np)

    out = pl.pallas_call(
        partial(_matmul_kernel, activation=activation),
        out_shape=jax.ShapeDtypeStruct((Mp, Np), out_dtype),
        grid_spec=pltpu.PrefetchScalarGridSpec(
            num_scalar_prefetch=0,
            grid=(Mp // tm, Np // tn, Kp // tk),
            in_specs=[
                pl.BlockSpec((tm, tk), lambda i, j, k: (i, k)),
                pl.BlockSpec((tk, tn), lambda i, j, k: (k, j)),   # constant index when resident
                pl.BlockSpec((1, tn), lambda i, j, k: (0, j)),
            ],
            out_specs=pl.BlockSpec((tm, tn), lambda i, j, k: (i, j)),
            scratch_shapes=[pltpu.VMEM((tm, tn), jnp.float32)],
        ),
        compiler_params=pltpu.CompilerParams(
            dimension_semantics=("parallel", "parallel", "arbitrary"),
            vmem_limit_bytes=VMEM_LIMIT_BYTES),
    )(xb, wb, bb)
    if (Mp, Np) != (M, N):
        out = out[:M, :N]
    return out


# ----------------------------- tiled matmul + bias + residual + LayerNorm (fused epilogue) -----------------------------

def _matmul_res_ln_kernel(x_ref, w_ref, b_ref, r_ref, g_ref, be_ref, o_ref, acc_ref, *, eps):
    @pl.when(pl.program_id(1) == 0)
    def _():
        acc_ref[...] = jnp.zeros_like(acc_ref)

    acc_ref[...] += jnp.dot(x_ref[...], w_ref[...], preferred_element_type=jnp.float32)

    @pl.when(pl.program_id(1) == pl.num_programs(1) - 1)
    def _():
        y = acc_ref[...] + b_ref[...] + r_ref[...].astype(jnp.float32)
        mean = jnp.mean(y, axis=-1, keepdims=True)
        var = jnp.mean(jnp.square(y - mean), axis=-1, keepdims=True)
        yn = (y - mean) * jax.lax.rsqrt(var + eps)
        o_ref[...] = (yn * g_ref[...] + be_ref[...]).astype(o_ref.dtype)


def matmul_bias_residual_layernorm(x, w, b, residual, gamma, beta, eps,
                                   out_dtype=jnp.bfloat16, tm=256, tk=3072):
    """LayerNorm(x @ w + b + residual).  N (hidden) stays un-tiled so LN sees the full row;
    with the default tk the weight is VMEM-resident (grid K = 1)."""
    M, K = x.shape
    N = w.shape[1]
    tm, Mp = _fit(M, tm)
    tk, Kp = _fit(K, tk)

    xb = _pad_to(_pad_to(x.astype(jnp.bfloat16), 0, Mp), 1, Kp)
    wb = _pad_to(w.astype(jnp.bfloat16), 0, Kp)
    rb = _pad_to(residual, 0, Mp)
    bb = b.astype(jnp.float32).reshape(1, N)
    gb = gamma.astype(jnp.float32).reshape(1, N)
    beb = beta.astype(jnp.float32).reshape(1, N)

    out = pl.pallas_call(
        partial(_matmul_res_ln_kernel, eps=eps),
        out_shape=jax.ShapeDtypeStruct((Mp, N), out_dtype),
        grid_spec=pltpu.PrefetchScalarGridSpec(
            num_scalar_prefetch=0,
            grid=(Mp // tm, Kp // tk),
            in_specs=[
                pl.BlockSpec((tm, tk), lambda i, k: (i, k)),
                pl.BlockSpec((tk, N), lambda i, k: (k, 0)),
                pl.BlockSpec((1, N), lambda i, k: (0, 0)),
                pl.BlockSpec((tm, N), lambda i, k: (i, 0)),
                pl.BlockSpec((1, N), lambda i, k: (0, 0)),
                pl.BlockSpec((1, N), lambda i, k: (0, 0)),
            ],
            out_specs=pl.BlockSpec((tm, N), lambda i, k: (i, 0)),
            scratch_shapes=[pltpu.VMEM((tm, N), jnp.float32)],
        ),
        compiler_params=pltpu.CompilerParams(
            dimension_semantics=("parallel", "arbitrary"),
            vmem_limit_bytes=VMEM_LIMIT_BYTES),
    )(xb, wb, bb, rb, gb, beb)
    if Mp != M:
        out = out[:M]
    return out


# ----------------------------- standalone LayerNorm (embedding epilogue) -----------------------------

def _layernorm_kernel(x_ref, g_ref, b_ref, o_ref, *, eps):
    x = x_ref[...].astype(jnp.float32)
    mean = jnp.mean(x, axis=-1, keepdims=True)
    var = jnp.mean(jnp.square(x - mean), axis=-1, keepdims=True)
    y = (x - mean) * jax.lax.rsqrt(var + eps)
    o_ref[...] = (y * g_ref[...] + b_ref[...]).astype(o_ref.dtype)


def layernorm(x, gamma, beta, eps, out_dtype=jnp.bfloat16, tm=256):
    M, N = x.shape
    tm, Mp = _fit(M, tm)
    xb = _pad_to(x, 0, Mp)
    out = pl.pallas_call(
        partial(_layernorm_kernel, eps=eps),
        out_shape=jax.ShapeDtypeStruct((Mp, N), out_dtype),
        grid_spec=pltpu.PrefetchScalarGridSpec(
            num_scalar_prefetch=0,
            grid=(Mp // tm,),
            in_specs=[
                pl.BlockSpec((tm, N), lambda i: (i, 0)),
                pl.BlockSpec((1, N), lambda i: (0, 0)),
                pl.BlockSpec((1, N), lambda i: (0, 0)),
            ],
            out_specs=pl.BlockSpec((tm, N), lambda i: (i, 0)),
        ),
        compiler_params=pltpu.CompilerParams(dimension_semantics=("parallel",)),
    )(xb, gamma.astype(jnp.float32).reshape(1, N), beta.astype(jnp.float32).reshape(1, N))
    if Mp != M:
        out = out[:M]
    return out


# ----------------------------- flash-style attention (reads the fused QKV slab directly) -----------------------------

def _flash_attn_kernel(q_ref, kv_ref, mb_ref, o_ref, m_sc, l_sc, acc_sc, *, nh, hd, H):
    ki = pl.program_id(2)

    @pl.when(ki == 0)
    def _():
        m_sc[...] = jnp.full_like(m_sc, -1e30)
        l_sc[...] = jnp.zeros_like(l_sc)
        acc_sc[...] = jnp.zeros_like(acc_sc)

    mb = mb_ref[0]                                           # (1, tkv) additive mask bias, f32

    # all heads processed inside one grid step: back-to-back MXU pushes amortize the
    # per-step softmax/control overhead and avoid any XLA head split/merge transposes.
    for h in range(nh):
        q_h = q_ref[0, :, h * hd:(h + 1) * hd]                       # (tq, hd) bf16, pre-scaled
        k_h = kv_ref[0, :, H + h * hd:H + (h + 1) * hd]              # (tkv, hd) bf16
        v_h = kv_ref[0, :, 2 * H + h * hd:2 * H + (h + 1) * hd]      # (tkv, hd) bf16

        s = jax.lax.dot_general(q_h, k_h, (((1,), (1,)), ((), ())),
                                preferred_element_type=jnp.float32)  # (tq, tkv) f32
        s = s + mb

        m_prev = m_sc[h]
        m_new = jnp.maximum(m_prev, jnp.max(s, axis=-1, keepdims=True))
        alpha = jnp.exp(m_prev - m_new)
        p = jnp.exp(s - m_new)
        l_sc[h] = alpha * l_sc[h] + jnp.sum(p, axis=-1, keepdims=True)
        acc_sc[h] = alpha * acc_sc[h] + jnp.dot(
            p.astype(v_h.dtype), v_h, preferred_element_type=jnp.float32)
        m_sc[h] = m_new

    @pl.when(ki == pl.num_programs(2) - 1)
    def _():
        # lane-dense (tq, H) output block, already in (B, S, H) layout
        for h in range(nh):
            o_ref[0, :, h * hd:(h + 1) * hd] = (
                acc_sc[h] * pl.reciprocal(l_sc[h], approx=True)).astype(o_ref.dtype)


def _attn_tiles(S):
    """(tq, tkv, Sp): single KV block for S <= 2K per the perf review."""
    if S <= 512:
        Sp = _round_up(S, 8)
        return Sp, Sp, Sp
    if S <= 2048:
        Sp = _round_up(S, 256)
        return 256, Sp, Sp
    Sp = _round_up(S, 512)
    return 256, 512, Sp


def flash_attention(qkv, mask_bias, B, S, nh, H, out_dtype=jnp.bfloat16):
    """qkv: (B*S, 3H) bf16 fused slab (Q columns pre-scaled by 1/sqrt(hd));
    mask_bias: (B, 1, S) additive f32 bias.  Returns (B*S, H) bf16 context."""
    hd = H // nh
    tq, tkv, Sp = _attn_tiles(S)

    qkv3 = _pad_to(qkv.reshape(B, S, 3 * H), 1, Sp)                  # free reshape + (maybe) pad
    mbp = _pad_to(mask_bias.astype(jnp.float32), 2, Sp, value=-1e9)

    out = pl.pallas_call(
        partial(_flash_attn_kernel, nh=nh, hd=hd, H=H),
        out_shape=jax.ShapeDtypeStruct((B, Sp, H), out_dtype),
        grid_spec=pltpu.PrefetchScalarGridSpec(
            num_scalar_prefetch=0,
            grid=(B, Sp // tq, Sp // tkv),
            in_specs=[
                # the same QKV slab is passed twice: once indexed by the q tile, once by the kv tile
                pl.BlockSpec((1, tq, 3 * H), lambda b, qi, ki: (b, qi, 0)),
                pl.BlockSpec((1, tkv, 3 * H), lambda b, qi, ki: (b, ki, 0)),
                pl.BlockSpec((1, 1, tkv), lambda b, qi, ki: (b, 0, ki)),
            ],
            out_specs=pl.BlockSpec((1, tq, H), lambda b, qi, ki: (b, qi, 0)),
            scratch_shapes=[
                pltpu.VMEM((nh, tq, 1), jnp.float32),     # m
                pltpu.VMEM((nh, tq, 1), jnp.float32),     # l
                pltpu.VMEM((nh, tq, hd), jnp.float32),    # acc
            ],
        ),
        compiler_params=pltpu.CompilerParams(
            dimension_semantics=("parallel", "parallel", "arbitrary"),
            vmem_limit_bytes=VMEM_LIMIT_BYTES),
    )(qkv3, qkv3, mbp)
    if Sp != S:
        out = out[:, :S, :]
    return out.reshape(B * S, H)


# ----------------------------- BERT forward (glue + kernels) -----------------------------

def bert_layer(x2, mask_bias, lp, B, S, cfg):
    """x2: (B*S, H) bf16 token slab.  Returns (B*S, H) bf16."""
    H = cfg["hidden_size"]
    nh = cfg["num_attention_heads"]
    eps = cfg["layer_norm_eps"]

    # fused QKV projection (1/sqrt(hd) folded into the Q slice of qkv_w/qkv_b)
    qkv = matmul_bias(x2, lp["qkv_w"], lp["qkv_b"])                    # (M, 3H) bf16
    # flash attention reads Q/K/V straight out of the slab; output is (M, H), no transposes
    ctx = flash_attention(qkv, mask_bias, B, S, nh, H)

    # attention output projection + residual + LayerNorm (fused); dropout = identity (eval)
    x2 = matmul_bias_residual_layernorm(ctx, lp["ao_w"], lp["ao_b"], x2,
                                        lp["ln1_g"], lp["ln1_b"], eps)
    # FFN: intermediate matmul with fused GELU, output matmul + residual + LayerNorm (fused)
    inter = matmul_bias(x2, lp["i_w"], lp["i_b"], activation="gelu")
    x2 = matmul_bias_residual_layernorm(inter, lp["o_w"], lp["o_b"], x2,
                                        lp["ln2_g"], lp["ln2_b"], eps)
    return x2


def text_model_forward(p, input_ids, attention_mask, cfg):
    B, S = input_ids.shape
    H = cfg["hidden_size"]
    eps = cfg["layer_norm_eps"]
    M = B * S

    emb = p["embeddings"]
    word = jnp.take(emb["word"], input_ids, axis=0)            # (B,S,H) gather in plain JAX
    pos = emb["pos"][:S][None, :, :]                           # (1,S,H)
    tok = emb["tok"][0][None, None, :]                         # token_type_ids default to 0 (HF)
    x_emb = (word + pos + tok).reshape(M, H)                   # f32
    x2 = layernorm(x_emb, emb["ln_g"], emb["ln_b"], eps)       # (M,H) bf16

    # additive mask bias kept in f32 (bf16 would overflow -1e9 -> NaNs for masked rows)
    mask_bias = ((1.0 - attention_mask.astype(jnp.float32)) * (-1e9)).reshape(B, 1, S)

    for lp in p["layers"]:
        x2 = bert_layer(x2, mask_bias, lp, B, S, cfg)

    cls = x2.reshape(B, S, H)[:, 0, :]                         # (B,H) bf16
    pooled = matmul_bias(cls, p["pooler_w"], p["pooler_b"], activation="tanh")
    text_features = matmul_bias(pooled, p["fc_text_w"], p["fc_text_b"])

    # all output heads fused into a single (256, sum(N)) matmul, sliced afterwards
    all_logits = matmul_bias(text_features, p["head_w"], p["head_b"], out_dtype=jnp.float32)
    nb = p["head_sizes"][0]
    binary_logits = all_logits[:, :nb]
    multiclass_logits = []
    off = nb
    for n in p["head_sizes"][1:]:
        multiclass_logits.append(all_logits[:, off:off + n])
        off += n
    return binary_logits, multiclass_logits


# ----------------------------- parameter prep (bf16 cast + fusions, done once) -----------------------------

def prepare_params(params, cfg):
    H = cfg["hidden_size"]
    nh = cfg["num_attention_heads"]
    hd = H // nh
    scale = 1.0 / math.sqrt(hd)
    bf = jnp.bfloat16

    layers = []
    for lp in params["layers"]:
        qkv_w = jnp.concatenate([lp["q_w"] * scale, lp["k_w"], lp["v_w"]], axis=1).astype(bf)
        qkv_b = jnp.concatenate([lp["q_b"] * scale, lp["k_b"], lp["v_b"]], axis=0)
        layers.append(dict(
            qkv_w=qkv_w, qkv_b=qkv_b,
            ao_w=lp["ao_w"].astype(bf), ao_b=lp["ao_b"],
            ln1_g=lp["ln1_g"], ln1_b=lp["ln1_b"],
            i_w=lp["i_w"].astype(bf), i_b=lp["i_b"],
            o_w=lp["o_w"].astype(bf), o_b=lp["o_b"],
            ln2_g=lp["ln2_g"], ln2_b=lp["ln2_b"],
        ))

    head_ws = [params["fc_binary_w"]] + [w for (w, _) in params["fc_multiclass"]]
    head_bs = [params["fc_binary_b"]] + [b for (_, b) in params["fc_multiclass"]]
    head_sizes = [int(w.shape[1]) for w in head_ws]

    return dict(
        embeddings=params["embeddings"],
        layers=layers,
        pooler_w=params["pooler_w"].astype(bf), pooler_b=params["pooler_b"],
        fc_text_w=params["fc_text_w"].astype(bf), fc_text_b=params["fc_text_b"],
        head_w=jnp.concatenate(head_ws, axis=1).astype(bf),
        head_b=jnp.concatenate(head_bs, axis=0),
        head_sizes=head_sizes,
    )


# ----------------------------- deterministic parameter init -----------------------------

def init_params(key, cfg, num_binary, num_multiclass):
    H = cfg["hidden_size"]
    I = cfg["intermediate_size"]
    keys = iter(jax.random.split(key, 512))

    def dense(din, dout):
        w = 0.02 * jax.random.normal(next(keys), (din, dout), jnp.float32)
        b = jnp.zeros((dout,), jnp.float32)
        return w, b

    embeddings = {
        "word": 0.02 * jax.random.normal(next(keys), (cfg["vocab_size"], H), jnp.float32),
        "pos": 0.02 * jax.random.normal(next(keys), (cfg["max_position_embeddings"], H), jnp.float32),
        "tok": 0.02 * jax.random.normal(next(keys), (cfg["type_vocab_size"], H), jnp.float32),
        "ln_g": jnp.ones((H,), jnp.float32),
        "ln_b": jnp.zeros((H,), jnp.float32),
    }

    layers = []
    for _ in range(cfg["num_hidden_layers"]):
        q_w, q_b = dense(H, H)
        k_w, k_b = dense(H, H)
        v_w, v_b = dense(H, H)
        ao_w, ao_b = dense(H, H)
        i_w, i_b = dense(H, I)
        o_w, o_b = dense(I, H)
        layers.append(dict(
            q_w=q_w, q_b=q_b, k_w=k_w, k_b=k_b, v_w=v_w, v_b=v_b,
            ao_w=ao_w, ao_b=ao_b,
            ln1_g=jnp.ones((H,), jnp.float32), ln1_b=jnp.zeros((H,), jnp.float32),
            i_w=i_w, i_b=i_b, o_w=o_w, o_b=o_b,
            ln2_g=jnp.ones((H,), jnp.float32), ln2_b=jnp.zeros((H,), jnp.float32),
        ))

    pooler_w, pooler_b = dense(H, H)
    fc_text_w, fc_text_b = dense(H, 256)
    fc_binary_w, fc_binary_b = dense(256, num_binary)
    fc_multiclass = [dense(256, n) for n in num_multiclass]

    return dict(
        embeddings=embeddings, layers=layers,
        pooler_w=pooler_w, pooler_b=pooler_b,
        fc_text_w=fc_text_w, fc_text_b=fc_text_b,
        fc_binary_w=fc_binary_w, fc_binary_b=fc_binary_b,
        fc_multiclass=fc_multiclass,
    )


# ----------------------------- main -----------------------------

if __name__ == "__main__":
    cfg = dict(
        vocab_size=100,
        hidden_size=32,
        num_hidden_layers=2,
        num_attention_heads=2,
        intermediate_size=64,
        max_position_embeddings=16,
        type_vocab_size=2,
        layer_norm_eps=1e-12,
    )
    num_binary = 3
    num_multiclass = [4, 5]

    key = jax.random.PRNGKey(0)
    k_params, k_ids = jax.random.split(key)
    raw_params = init_params(k_params, cfg, num_binary, num_multiclass)
    params = prepare_params(raw_params, cfg)

    B, S = 2, 8
    input_ids = jax.random.randint(k_ids, (B, S), 0, cfg["vocab_size"], dtype=jnp.int32)
    attention_mask = jnp.array(
        [[1, 1, 1, 1, 1, 1, 1, 1],
         [1, 1, 1, 1, 1, 0, 0, 0]], dtype=jnp.int32)

    binary_logits, multiclass_logits = text_model_forward(params, input_ids, attention_mask, cfg)

    jax.block_until_ready(binary_logits)
    for t in multiclass_logits:
        jax.block_until_ready(t)

    assert binary_logits.shape == (B, num_binary)
    assert [t.shape for t in multiclass_logits] == [(B, n) for n in num_multiclass]
    assert bool(jnp.all(jnp.isfinite(binary_logits)))
    print("KERNEL_OK")
</pallas_src>

<mosaic_0001>
module attributes {stable_mosaic.version = 11 : i64} {
  func.func @_layernorm_kernel(%arg0: i32, %arg1: memref<16x32xf32, #tpu.memory_space<vmem>>, %arg2: memref<1x32xf32, #tpu.memory_space<vmem>>, %arg3: memref<1x32xf32, #tpu.memory_space<vmem>>, %arg4: memref<16x32xbf16, #tpu.memory_space<vmem>>) attributes {dimension_semantics = [#tpu.dimension_semantics<parallel>], iteration_bounds = array<i64: 1>, scalar_prefetch = 0 : i64, scratch_operands = 0 : i64, tpu.core_type = #tpu.core_type<tc>, window_params = [{transform_indices = @transform_0, window_bounds = array<i64: 16, 32>}, {pipeline_mode = #tpu.pipeline_mode<synchronous>, transform_indices = @transform_1, window_bounds = array<i64: 1, 32>}, {pipeline_mode = #tpu.pipeline_mode<synchronous>, transform_indices = @transform_2, window_bounds = array<i64: 1, 32>}, {transform_indices = @transform_3, window_bounds = array<i64: 16, 32>}]} {
    %c0 = arith.constant 0 : index
    %c0_0 = arith.constant 0 : index
    %0 = vector.load %arg1[%c0, %c0_0] : memref<16x32xf32, #tpu.memory_space<vmem>>, vector<16x32xf32>
    %cst = arith.constant dense<0.000000e+00> : vector<16xf32>
    %1 = vector.multi_reduction <add>, %0, %cst [1] : vector<16x32xf32> to vector<16xf32>
    %2 = vector.shape_cast %1 : vector<16xf32> to vector<16x1xf32>
    %cst_1 = arith.constant 3.200000e+01 : f32
    %3 = vector.broadcast %cst_1 : f32 to vector<16x1xf32>
    %4 = arith.divf %2, %3 : vector<16x1xf32>
    %5 = vector.broadcast %4 : vector<16x1xf32> to vector<16x32xf32>
    %6 = arith.subf %0, %5 : vector<16x32xf32>
    %7 = arith.mulf %6, %6 : vector<16x32xf32>
    %cst_2 = arith.constant dense<0.000000e+00> : vector<16xf32>
    %8 = vector.multi_reduction <add>, %7, %cst_2 [1] : vector<16x32xf32> to vector<16xf32>
    %9 = vector.shape_cast %8 : vector<16xf32> to vector<16x1xf32>
    %cst_3 = arith.constant 3.200000e+01 : f32
    %10 = vector.broadcast %cst_3 : f32 to vector<16x1xf32>
    %11 = arith.divf %9, %10 : vector<16x1xf32>
    %12 = vector.broadcast %4 : vector<16x1xf32> to vector<16x32xf32>
    %13 = arith.subf %0, %12 : vector<16x32xf32>
    %cst_4 = arith.constant 9.99999996E-13 : f32
    %14 = vector.broadcast %cst_4 : f32 to vector<16x1xf32>
    %15 = arith.addf %11, %14 : vector<16x1xf32>
    %16 = math.rsqrt %15 : vector<16x1xf32>
    %17 = vector.broadcast %16 : vector<16x1xf32> to vector<16x32xf32>
    %18 = arith.mulf %13, %17 : vector<16x32xf32>
    %c0_5 = arith.constant 0 : index
    %c0_6 = arith.constant 0 : index
    %19 = vector.load %arg2[%c0_5, %c0_6] : memref<1x32xf32, #tpu.memory_space<vmem>>, vector<1x32xf32>
    %20 = vector.broadcast %19 : vector<1x32xf32> to vector<16x32xf32>
    %21 = arith.mulf %18, %20 : vector<16x32xf32>
    %c0_7 = arith.constant 0 : index
    %c0_8 = arith.constant 0 : index
    %22 = vector.load %arg3[%c0_7, %c0_8] : memref<1x32xf32, #tpu.memory_space<vmem>>, vector<1x32xf32>
    %23 = vector.broadcast %22 : vector<1x32xf32> to vector<16x32xf32>
    %24 = arith.addf %21, %23 : vector<16x32xf32>
    %25 = arith.truncf %24 : vector<16x32xf32> to vector<16x32xbf16>
    %c0_9 = arith.constant 0 : index
    %c0_10 = arith.constant 0 : index
    %26 = vector.load %arg4[%c0_9, %c0_10] : memref<16x32xbf16, #tpu.memory_space<vmem>>, vector<16x32xbf16>
    tpu.vector_store %arg4[%c0_9, %c0_10], %25 {strides = array<i32>} : memref<16x32xbf16, #tpu.memory_space<vmem>>, vector<16x32xbf16>,
    return
  }
  func.func @transform_0(%arg0: i32) -> (i32, i32) {
    %c0_i32 = arith.constant 0 : i32
    %c0_i32_0 = arith.constant 0 : i32
    return %arg0, %c0_i32 : i32, i32
  }
  func.func @transform_1(%arg0: i32) -> (i32, i32) {
    %c0_i32 = arith.constant 0 : i32
    %c0_i32_0 = arith.constant 0 : i32
    %c0_i32_1 = arith.constant 0 : i32
    return %c0_i32, %c0_i32_0 : i32, i32
  }
  func.func @transform_2(%arg0: i32) -> (i32, i32) {
    %c0_i32 = arith.constant 0 : i32
    %c0_i32_0 = arith.constant 0 : i32
    %c0_i32_1 = arith.constant 0 : i32
    return %c0_i32, %c0_i32_0 : i32, i32
  }
  func.func @transform_3(%arg0: i32) -> (i32, i32) {
    %c0_i32 = arith.constant 0 : i32
    %c0_i32_0 = arith.constant 0 : i32
    return %arg0, %c0_i32 : i32, i32
  }
}

</mosaic_0001>

<llo_original>
// kernel: tpu_custom_call.1
$region0: #{tpu_custom_call.1}
  #allocation0 [shape = 'u32[]', space=smem, size = 0x4, offset = 0x4, fixed_abs, tag = 'smem constant byte address 0x4 - core index']
  #allocation1 [shape = 'u32[144,128]{1,0:T(1,128)}', space=vmem, size = 0x12000, scoped, tag = 'internal scratch']
  %s0 = inlined_call_operand.hbm [shape: f32[16,32], index: 0, kind: input, shape index: {}]
  %s1 = inlined_call_operand.vmem [shape: f32[1,32], index: 1, kind: input, shape index: {}]
  %s2 = inlined_call_operand.vmem [shape: f32[1,32], index: 2, kind: input, shape index: {}]
  %s3 = inlined_call_operand.hbm [shape: bf16[16,32], index: 3, kind: output, shape index: {}]
  %s4 = sld [smem:[#allocation0]]
  $region26: #{tpu_custom_call.1} parent=0
    _
  %s6 = ssub.s32 1, %s4
  %s7 = scalar_select 0, %s6, %s4
  $region1: #{tpu_custom_call.1} parent=0
    #allocation2 [shape = 'u8[8192]{0}', space=vmem, size = 0x2000, scoped, tag = 'input window, operand 0, single buffered']
    #allocation3 [shape = 's32[1]{0}', space=sflag, size = 0x4, scoped, tag = 'scoped memory for tpu_custom_call.1']
    #allocation4 [shape = 's32[1]{0}', space=sflag, size = 0x4, scoped, tag = 'scoped memory for tpu_custom_call.1']
    #allocation5 [shape = 'u8[4096]{0}', space=vmem, size = 0x1000, scoped, tag = 'output window, operand 0, single buffered']
    %8 = vsyncpa [#allocation3], 0
    %9 = vsyncpa [#allocation4], 0
    // Predicated region
    $region2: #{tpu_custom_call.1} parent=1 // pred_check
      _
    $region3: #{tpu_custom_call.1} parent=1 // pred_check_branch
      %11 = sbr.rel (0) target = $region5
    $region4: #{tpu_custom_call.1} parent=1 // pred_region
      %s13 = ssub.s32 256, 256
      %14 = vsyncadd [#allocation3], %s13
      %s15 = sshll.u32 [#allocation2], 4
      %s16 = int_to_ptr.vmem [resolvable:$true] %s15
      %21 = dma.hbm_to_vmem [thread:$0]  %s0, 256, %s16, [#allocation3], 128, 128, 8
    $region5: #{tpu_custom_call.1} parent=1 // pred_fallthru
      _
    // Predicated region
    $region6: #{tpu_custom_call.1} parent=1 // pred_check
      _
    $region7: #{tpu_custom_call.1} parent=1 // pred_check_branch
      %23 = sbr.rel (0) target = $region9
    $region8: #{tpu_custom_call.1} parent=1 // pred_region
      _
    $region9: #{tpu_custom_call.1} parent=1 // pred_fallthru
      _
    // Predicated region
    $region10: #{tpu_custom_call.1} parent=1 // pred_check
      _
    $region11: #{tpu_custom_call.1} parent=1 // pred_check_branch
      %25 = sbr.rel (0) target = $region13
    $region12: #{tpu_custom_call.1} parent=1 // pred_region
      _
    $region13: #{tpu_custom_call.1} parent=1 // pred_fallthru
      _
    // Predicated region
    $region14: #{tpu_custom_call.1} parent=1 // pred_check
      _
    $region15: #{tpu_custom_call.1} parent=1 // pred_check_branch
      %27 = sbr.rel (0) target = $region17
    $region16: #{tpu_custom_call.1} parent=1 // pred_region
      %28 = dma.done [#allocation3], 256
    $region17: #{tpu_custom_call.1} parent=1 // pred_fallthru
      _
    %v29 = vld [vmem:[#allocation2] sm:$0xff]
    %v30 = vld [vmem:[#allocation2 + $0x8] sm:$0xff]
    %vm31 = vcmask 261120
    %v32 = vsel %vm31, %v29, 0.0
    %33 = vadd.xlane.f32.xlu0 %v32
    %v34 = vpop.xlane.xlu0 %33
    %v35 = vsel %vm31, %v30, 0.0
    %36 = vadd.xlane.f32.xlu0 %v35
    %v37 = vpop.xlane.xlu0 %36
    %v38 = vrcp.pop 32.0
    %v39 = vmul.f32 %v34, %v38
    %v40 = vmul.f32 %v37, %v38
    %v41 = vsub.f32 %v29, %v39
    %v42 = vsub.f32 %v30, %v40
    %v43 = vmul.f32 %v41, %v41
    %v44 = vmul.f32 %v42, %v42
    %v45 = vsel %vm31, %v43, 0.0
    %46 = vadd.xlane.f32.xlu0 %v45
    %v47 = vpop.xlane.xlu0 %46
    %v48 = vsel %vm31, %v44, 0.0
    %49 = vadd.xlane.f32.xlu0 %v48
    %v50 = vpop.xlane.xlu0 %49
    %v51 = vmul.f32 %v47, %v38
    %v52 = vmul.f32 %v50, %v38
    %v53 = vadd.f32 %v51, 1e-12
    %v54 = vadd.f32 %v52, 1e-12
    %v55 = vrsqrt.pop %v53
    %v56 = vrsqrt.pop %v54
    %v57 = vmul.f32 %v41, %v55
    %v58 = vmul.f32 %v42, %v56
    %v59 = vld [vmem:[%s1] sm:$0x1]
    %v61 = vlaneseq
    %v62 = vshrl.u32 %v61, 7
    %v63 = vsub.s32 0, %v62
    %v64 = vrot.slane %v59, %v63
    %v66 = vmul.f32 %v57, %v64
    %v67 = vmul.f32 %v58, %v64
    %v68 = vld [vmem:[%s2] sm:$0x1]
    %v70 = vlaneseq
    %v71 = vshrl.u32 %v70, 7
    %v72 = vsub.s32 0, %v71
    %v73 = vrot.slane %v68, %v72
    %v75 = vadd.f32 %v66, %v73
    %v76 = vadd.f32 %v67, %v73
    %v77 = vpack.c.bf16 %v76, %v75
    %v79 = vunpack.c.l.b16 %v77
    %v80 = vunpack.c.h.b16 %v77
    %v81 = vpack.c.b16 %v79, %v79
    %v82 = vpack.c.b16 %v80, %v80
    %vm85 = vcmask 257024
    %86 = vst.msk [vmem:[#allocation5] sm:$0xf] %vm85, %v81
    %87 = vst.msk [vmem:[#allocation5 + $0x4] sm:$0xf] %vm85, %v82
    // Predicated region
    $region18: #{tpu_custom_call.1} parent=1 // pred_check
      _
    $region19: #{tpu_custom_call.1} parent=1 // pred_check_branch
      %89 = sbr.rel (0) target = $region21
    $region20: #{tpu_custom_call.1} parent=1 // pred_region
      %s91 = ssub.s32 128, 128
      %92 = vsyncadd [#allocation4], %s91
      %s93 = sshll.u32 [#allocation5], 4
      %s94 = int_to_ptr.vmem [resolvable:$true] %s93
      %99 = dma.vmem_to_hbm [thread:$0]  %s94, 128, %s3, [#allocation4], 64, 64, 4
    $region21: #{tpu_custom_call.1} parent=1 // pred_fallthru
      _
    // Predicated region
    $region22: #{tpu_custom_call.1} parent=1 // pred_check
      _
    $region23: #{tpu_custom_call.1} parent=1 // pred_check_branch
      %101 = sbr.rel (0) target = $region25
    $region24: #{tpu_custom_call.1} parent=1 // pred_region
      %102 = dma.done [#allocation4], 128
    $region25: #{tpu_custom_call.1} parent=1 // pred_fallthru
      _
    %103 = vsyncpa [#allocation3], 1
    %104 = vsyncpa [#allocation4], 1

</llo_original>
